<compile_context>
chip_gen: v7x
topology: tpu7x:2x2x1
jax: 0.10.0
libtpu: 0.0.40
codegen_flags: <defaults>
</compile_context>

<pallas_src>
import jax
import jax.numpy as jnp
from jax.experimental import pallas as pl
from jax.experimental.pallas import tpu as pltpu


# ---------------------------------------------------------------------------
# Kernels
# ---------------------------------------------------------------------------

def _packed_matmul_kernel(x_ref, wb_ref, o_ref):
    # x_ref : (R, 128) tile -- P original batch rows packed per 128-lane row.
    # wb_ref: (128, P) block-diagonal weight, same block every step (VMEM resident).
    # o_ref : (R, P) output tile; row-major reshape back to (N, 1) is free.
    o_ref[...] = jnp.dot(
        x_ref[...], wb_ref[...], preferred_element_type=jnp.float32
    ).astype(o_ref.dtype)


def _rowsum_kernel(x_ref, w_ref, o_ref):
    # x_ref: (R, d) streamed batch tile; w_ref: (1, d) weight row (VMEM resident).
    # Multiply in the input dtype (native bf16 VPU on v6e/v7x), accumulate in f32.
    prod = (x_ref[...] * w_ref[...]).astype(jnp.float32)
    o_ref[...] = jnp.sum(prod, axis=-1, keepdims=True).astype(o_ref.dtype)


# ---------------------------------------------------------------------------
# Wrapper
# ---------------------------------------------------------------------------

def _vmem_limit_bytes() -> int:
    # Generation-aware scoped-VMEM budget; conservative fallback if the query
    # is unavailable.  Our per-step tiles are only a few MiB, so this is ample.
    try:
        cap = int(pltpu.get_tpu_info().vmem_capacity_bytes)
    except Exception:
        cap = 64 * 1024 * 1024
    return min(int(cap * 3 // 4), 96 * 1024 * 1024)


def _sublane_multiple(itemsize: int) -> int:
    # f32 -> 8, bf16 -> 16, int8/fp8 -> 32 sublane rows per packed vreg row.
    return {4: 8, 2: 16, 1: 32}.get(int(itemsize), 8)


def net_forward(x: jax.Array, w: jax.Array, *,
                target_block_bytes: int = 2 * 1024 * 1024) -> jax.Array:
    """y = x @ w.T ;  x: (N, d), w: PyTorch nn.Linear(d, 1, bias=False).weight (1, d)."""
    n, d = x.shape
    if w.ndim == 1:
        w = w.reshape(1, d)
    if w.shape == (d, 1):
        w = w.T
    assert w.shape == (1, d)
    w = w.astype(x.dtype)

    if n == 0:
        return jnp.zeros((0, 1), x.dtype)

    itemsize = int(jnp.dtype(x.dtype).itemsize)
    sub = _sublane_multiple(itemsize)

    compiler_params = pltpu.CompilerParams(
        dimension_semantics=("parallel",),          # batch tiles are independent
        vmem_limit_bytes=_vmem_limit_bytes(),
    )

    # ---------------- packed path: d < 128, 128 % d == 0, N % P == 0 ----------
    p = (128 // d) if (0 < d < 128 and 128 % d == 0) else 0
    if p > 1 and n % p == 0:
        m = n // p                                   # packed rows
        xp = x.reshape(m, 128)                       # free row-major reinterpretation
        # Block-diagonal weight: wb[g*d + j, g] = w[0, j]  ->  one MXU matmul
        # computes P row-sums per packed row.
        wb = jnp.kron(jnp.eye(p, dtype=x.dtype), w.reshape(d, 1))   # (128, p)

        row_bytes = 128 * itemsize
        r = max(sub, (target_block_bytes // row_bytes) // sub * sub)
        r = min(r, pl.cdiv(m, sub) * sub)
        nb = pl.cdiv(m, r)

        cost = pl.CostEstimate(
            flops=2 * m * 128 * p,
            transcendentals=0,
            bytes_accessed=m * 128 * itemsize + 128 * p * itemsize + m * p * itemsize,
        )

        yp = pl.pallas_call(
            _packed_matmul_kernel,
            out_shape=jax.ShapeDtypeStruct((m, p), x.dtype),
            grid=(nb,),
            in_specs=[
                # Streamed, lane-dense x tiles: DMA of tile i+1 overlaps compute of i.
                pl.BlockSpec((r, 128), lambda i: (i, 0)),
                # Weight block: same block every step -> stays VMEM resident.
                pl.BlockSpec((128, p), lambda i: (0, 0)),
            ],
            out_specs=pl.BlockSpec((r, p), lambda i: (i, 0)),
            compiler_params=compiler_params,
            cost_estimate=cost,
        )(xp, wb)
        return yp.reshape(n, 1)                      # free row-major reinterpretation

    # ---------------- generic path: full feature dim per block ----------------
    row_bytes = d * itemsize
    r = max(sub, (target_block_bytes // row_bytes) // sub * sub)
    r = min(r, pl.cdiv(n, sub) * sub)
    nb = pl.cdiv(n, r)                               # ragged grid; no padding of x

    cost = pl.CostEstimate(
        flops=2 * n * d,
        transcendentals=0,
        bytes_accessed=n * d * itemsize + d * itemsize + n * itemsize,
    )

    return pl.pallas_call(
        _rowsum_kernel,
        out_shape=jax.ShapeDtypeStruct((n, 1), x.dtype),
        grid=(nb,),
        in_specs=[
            pl.BlockSpec((r, d), lambda i: (i, 0)),
            pl.BlockSpec((1, d), lambda i: (0, 0)),
        ],
        out_specs=pl.BlockSpec((r, 1), lambda i: (i, 0)),
        compiler_params=compiler_params,
        cost_estimate=cost,
    )(x, w)


# ---------------------------------------------------------------------------
# Demo / self-check
# ---------------------------------------------------------------------------

if __name__ == "__main__":
    key = jax.random.PRNGKey(0)
    k1, k2, k3, k4, k5 = jax.random.split(key, 5)

    # Case 1: packed MXU path (d=32 -> 4 batch rows per 128-lane row), tiny shapes.
    N, D = 8, 32
    x = jax.random.normal(k1, (N, D), dtype=jnp.float32)
    bound = 1.0 / jnp.sqrt(jnp.float32(D))
    w = jax.random.uniform(k2, (1, D), dtype=jnp.float32, minval=-bound, maxval=bound)
    y = jax.block_until_ready(net_forward(x, w))
    y_ref = (x * w).sum(axis=-1, keepdims=True)
    assert y.shape == (N, 1)
    assert jnp.allclose(y, y_ref, atol=1e-3, rtol=1e-3)

    # Case 2: packed path, multiple grid steps (small block bytes force 8 steps).
    N2 = 1024
    x2 = jax.random.normal(k3, (N2, D), dtype=jnp.float32)
    y2 = jax.block_until_ready(net_forward(x2, w, target_block_bytes=16 * 1024))
    y2_ref = (x2 * w).sum(axis=-1, keepdims=True)
    assert y2.shape == (N2, 1)
    assert jnp.allclose(y2, y2_ref, atol=1e-3, rtol=1e-3)

    # Case 3: generic VPU path, ragged N (no padding), multiple grid steps,
    # feature dim that does not divide 128.
    N3, D3 = 1030, 48
    x3 = jax.random.normal(k4, (N3, D3), dtype=jnp.float32)
    bound3 = 1.0 / jnp.sqrt(jnp.float32(D3))
    w3 = jax.random.uniform(k5, (1, D3), dtype=jnp.float32, minval=-bound3, maxval=bound3)
    y3 = jax.block_until_ready(net_forward(x3, w3, target_block_bytes=64 * 1024))
    y3_ref = (x3 * w3).sum(axis=-1, keepdims=True)
    assert y3.shape == (N3, 1)
    assert jnp.allclose(y3, y3_ref, atol=1e-4, rtol=1e-4)

    print("KERNEL_OK")
</pallas_src>

<mosaic_0001>
module attributes {stable_mosaic.version = 11 : i64} {
  func.func @_packed_matmul_kernel(%arg0: i32, %arg1: memref<8x128xf32, #tpu.memory_space<vmem>>, %arg2: memref<128x4xf32, #tpu.memory_space<vmem>>, %arg3: memref<8x4xf32, #tpu.memory_space<vmem>>) attributes {dimension_semantics = [#tpu.dimension_semantics<parallel>], iteration_bounds = array<i64: 1>, scalar_prefetch = 0 : i64, scratch_operands = 0 : i64, tpu.core_type = #tpu.core_type<tc>, window_params = [{transform_indices = @transform_0, window_bounds = array<i64: 8, 128>}, {pipeline_mode = #tpu.pipeline_mode<synchronous>, transform_indices = @transform_1, window_bounds = array<i64: 128, 4>}, {transform_indices = @transform_2, window_bounds = array<i64: 8, 4>}]} {
    %c0 = arith.constant 0 : index
    %c0_0 = arith.constant 0 : index
    %0 = vector.load %arg1[%c0, %c0_0] : memref<8x128xf32, #tpu.memory_space<vmem>>, vector<8x128xf32>
    %c0_1 = arith.constant 0 : index
    %c0_2 = arith.constant 0 : index
    %1 = vector.load %arg2[%c0_1, %c0_2] : memref<128x4xf32, #tpu.memory_space<vmem>>, vector<128x4xf32>
    %cst = arith.constant dense<0.000000e+00> : vector<8x4xf32>
    %2 = tpu.matmul %0, %1, %cst {dimension_numbers = #tpu.dot_dimension_numbers<[1], [0], [0], [1], [0, 0, 1, 1], [], []>} : vector<8x128xf32>, vector<128x4xf32>, vector<8x4xf32> -> vector<8x4xf32>
    %c0_3 = arith.constant 0 : index
    %c0_4 = arith.constant 0 : index
    %3 = vector.load %arg3[%c0_3, %c0_4] : memref<8x4xf32, #tpu.memory_space<vmem>>, vector<8x4xf32>
    tpu.vector_store %arg3[%c0_3, %c0_4], %2 {strides = array<i32>} : memref<8x4xf32, #tpu.memory_space<vmem>>, vector<8x4xf32>,
    return
  }
  func.func @transform_0(%arg0: i32) -> (i32, i32) {
    %c0_i32 = arith.constant 0 : i32
    %c0_i32_0 = arith.constant 0 : i32
    return %arg0, %c0_i32 : i32, i32
  }
  func.func @transform_1(%arg0: i32) -> (i32, i32) {
    %c0_i32 = arith.constant 0 : i32
    %c0_i32_0 = arith.constant 0 : i32
    %c0_i32_1 = arith.constant 0 : i32
    return %c0_i32, %c0_i32_0 : i32, i32
  }
  func.func @transform_2(%arg0: i32) -> (i32, i32) {
    %c0_i32 = arith.constant 0 : i32
    %c0_i32_0 = arith.constant 0 : i32
    return %arg0, %c0_i32 : i32, i32
  }
}

</mosaic_0001>

<llo_original>
// kernel: tpu_custom_call.1
$region0: #{tpu_custom_call.1}
  #allocation0 [shape = 'u32[]', space=smem, size = 0x4, offset = 0x4, fixed_abs, tag = 'smem constant byte address 0x4 - core index']
  #allocation1 [shape = 'u32[144,128]{1,0:T(1,128)}', space=vmem, size = 0x12000, scoped, tag = 'internal scratch']
  %s0 = inlined_call_operand.vmem [shape: f32[2,128], index: 0, kind: input, shape index: {}]
  %s1 = inlined_call_operand.vmem [shape: f32[128,4], index: 1, kind: input, shape index: {}]
  %s2 = inlined_call_operand.hbm [shape: f32[2,4], index: 2, kind: output, shape index: {}]
  %s3 = sld [smem:[#allocation0]]
  $region18: #{tpu_custom_call.1} parent=0
    _
  %s5 = ssub.s32 1, %s3
  %s6 = scalar_select 0, %s5, %s3
  $region1: #{tpu_custom_call.1} parent=0
    #allocation2 [shape = 'u8[4096]{0}', space=vmem, size = 0x1000, scoped, tag = 'output window, operand 0, single buffered']
    #allocation3 [shape = 's32[1]{0}', space=sflag, size = 0x4, scoped, tag = 'scoped memory for tpu_custom_call.1']
    %7 = vsyncpa [#allocation3], 0
    // Predicated region
    $region2: #{tpu_custom_call.1} parent=1 // pred_check
      _
    $region3: #{tpu_custom_call.1} parent=1 // pred_check_branch
      %9 = sbr.rel (0) target = $region5
    $region4: #{tpu_custom_call.1} parent=1 // pred_region
      _
    $region5: #{tpu_custom_call.1} parent=1 // pred_fallthru
      _
    // Predicated region
    $region6: #{tpu_custom_call.1} parent=1 // pred_check
      _
    $region7: #{tpu_custom_call.1} parent=1 // pred_check_branch
      %11 = sbr.rel (0) target = $region9
    $region8: #{tpu_custom_call.1} parent=1 // pred_region
      _
    $region9: #{tpu_custom_call.1} parent=1 // pred_fallthru
      _
    %v12 = vld [vmem:[%s0] sm:$0xff]
    %v13 = vld [vmem:[%s1] sm:$0xff]
    %v14 = vld [vmem:[%s1 + $0x8] sm:$0xff]
    %v15 = vld [vmem:[%s1 + $0x10] sm:$0xff]
    %v16 = vld [vmem:[%s1 + $0x18] sm:$0xff]
    %v17 = vld [vmem:[%s1 + $0x20] sm:$0xff]
    %v18 = vld [vmem:[%s1 + $0x28] sm:$0xff]
    %v19 = vld [vmem:[%s1 + $0x30] sm:$0xff]
    %v20 = vld [vmem:[%s1 + $0x38] sm:$0xff]
    %v21 = vld [vmem:[%s1 + $0x40] sm:$0xff]
    %v22 = vld [vmem:[%s1 + $0x48] sm:$0xff]
    %v23 = vld [vmem:[%s1 + $0x50] sm:$0xff]
    %v24 = vld [vmem:[%s1 + $0x58] sm:$0xff]
    %v25 = vld [vmem:[%s1 + $0x60] sm:$0xff]
    %v26 = vld [vmem:[%s1 + $0x68] sm:$0xff]
    %v27 = vld [vmem:[%s1 + $0x70] sm:$0xff]
    %v28 = vld [vmem:[%s1 + $0x78] sm:$0xff]
    %29 = vmatprep.subr.mxu0 0.0
    %30 = vmatpush1.msra.mxu0 %v13
    %31 = vmatprep.subr.mxu0 0.0
    %32 = vmatpush1.msra.mxu0 %v14
    %33 = vmatprep.subr.mxu0 0.0
    %34 = vmatpush1.msra.mxu0 %v15
    %35 = vmatprep.subr.mxu0 0.0
    %36 = vmatpush1.msra.mxu0 %v16
    %37 = vmatprep.subr.mxu0 0.0
    %38 = vmatpush1.msra.mxu0 %v17
    %39 = vmatprep.subr.mxu0 0.0
    %40 = vmatpush1.msra.mxu0 %v18
    %41 = vmatprep.subr.mxu0 0.0
    %42 = vmatpush1.msra.mxu0 %v19
    %43 = vmatprep.subr.mxu0 0.0
    %44 = vmatpush1.msra.mxu0 %v20
    %45 = vmatprep.subr.mxu0 0.0
    %46 = vmatpush1.msra.mxu0 %v21
    %47 = vmatprep.subr.mxu0 0.0
    %48 = vmatpush1.msra.mxu0 %v22
    %49 = vmatprep.subr.mxu0 0.0
    %50 = vmatpush1.msra.mxu0 %v23
    %51 = vmatprep.subr.mxu0 0.0
    %52 = vmatpush1.msra.mxu0 %v24
    %53 = vmatprep.subr.mxu0 0.0
    %54 = vmatpush1.msra.mxu0 %v25
    %55 = vmatprep.subr.mxu0 0.0
    %56 = vmatpush1.msra.mxu0 %v26
    %57 = vmatprep.subr.mxu0 0.0
    %58 = vmatpush1.msra.mxu0 %v27
    %59 = vmatprep.subr.mxu0 0.0
    %60 = vmatpush1.msra.mxu0 %v28
    %61 = vmatprep.subr.mxu0 0.0
    %62 = vmatpush1.msra.mxu0 0.0
    %63 = vmatprep.subr.mxu0 0.0
    %64 = vmatpush1.msra.mxu0 0.0
    %65 = vmatprep.subr.mxu0 0.0
    %66 = vmatpush1.msra.mxu0 0.0
    %67 = vmatprep.subr.mxu0 0.0
    %68 = vmatpush1.msra.mxu0 0.0
    %69 = vmatprep.subr.mxu0 0.0
    %70 = vmatpush1.msra.mxu0 0.0
    %71 = vmatprep.subr.mxu0 0.0
    %72 = vmatpush1.msra.mxu0 0.0
    %73 = vmatprep.subr.mxu0 0.0
    %74 = vmatpush1.msra.mxu0 0.0
    %75 = vmatprep.subr.mxu0 0.0
    %76 = vmatpush1.msra.mxu0 0.0
    %77 = vmatprep.subr.mxu0 0.0
    %78 = vmatpush1.msra.mxu0 0.0
    %79 = vmatprep.subr.mxu0 0.0
    %80 = vmatpush1.msra.mxu0 0.0
    %81 = vmatprep.subr.mxu0 0.0
    %82 = vmatpush1.msra.mxu0 0.0
    %83 = vmatprep.subr.mxu0 0.0
    %84 = vmatpush1.msra.mxu0 0.0
    %85 = vmatprep.subr.mxu0 0.0
    %86 = vmatpush1.msra.mxu0 0.0
    %87 = vmatprep.subr.mxu0 0.0
    %88 = vmatpush1.msra.mxu0 0.0
    %89 = vmatprep.subr.mxu0 0.0
    %90 = vmatpush1.msra.mxu0 0.0
    %91 = vmatprep.subr.mxu0 0.0
    %92 = vmatpush1.msra.mxu0 0.0
    %93 = vmatprep.mubr.f32.mxu0 0.0
    %94 = vmatmul.mubr.f32.gmra.mrb[0].mxu0 %v12
    %v95 = vpop.f32.mrb[0].mxu0
    %v96 = vadd.f32 0.0, %v95
    %v97 = vpop.f32.mrb[0].mxu0
    %98 = vdwg.mxu0
    %vm99 = vcmask 31744
    %100 = vst.msk [vmem:[#allocation2] sm:$0xff] %vm99, %v96
    // Predicated region
    $region10: #{tpu_custom_call.1} parent=1 // pred_check
      _
    $region11: #{tpu_custom_call.1} parent=1 // pred_check_branch
      %102 = sbr.rel (0) target = $region13
    $region12: #{tpu_custom_call.1} parent=1 // pred_region
      %s104 = ssub.s32 128, 32
      %105 = vsyncadd [#allocation3], %s104
      %s106 = sshll.u32 [#allocation2], 4
      %s107 = int_to_ptr.vmem [resolvable:$true] %s106
      %112 = dma.vmem_to_hbm [thread:$0]  %s107, 32, %s2, [#allocation3], 32, 32, 2
    $region13: #{tpu_custom_call.1} parent=1 // pred_fallthru
      _
    // Predicated region
    $region14: #{tpu_custom_call.1} parent=1 // pred_check
      _
    $region15: #{tpu_custom_call.1} parent=1 // pred_check_branch
      %114 = sbr.rel (0) target = $region17
    $region16: #{tpu_custom_call.1} parent=1 // pred_region
      %115 = dma.done [#allocation3], 128
    $region17: #{tpu_custom_call.1} parent=1 // pred_fallthru
      _
    %116 = vsyncpa [#allocation3], 1

</llo_original>
